<compile_context>
chip_gen: v6e
topology: v6e:2x2x1
jax: 0.10.0
libtpu: 0.0.40
codegen_flags: <defaults>
</compile_context>

<pallas_src>
import functools

import jax
import jax.numpy as jnp
from jax.experimental import pallas as pl
from jax.experimental.pallas import tpu as pltpu

NUM_LAYERS = 4


def _round_up(x, m):
    return ((x + m - 1) // m) * m


def _vmem_limit_bytes():
    """Generation-aware VMEM limit with headroom for compiler scratch/semaphores."""
    try:
        cap = pltpu.get_tpu_info().vmem_capacity_bytes
    except Exception:
        cap = 64 * 1024 * 1024
    return min(int(cap * 3 // 4), 100 * 1024 * 1024)


def lightgcn_kernel(emb0_ref, a_ref, out_ref, emb_pp, acc, acc_tile):
    """Grid step (layer l, row tile i, k tile): partial product A[i, k] @ emb_l[k]."""
    l = pl.program_id(0)
    i = pl.program_id(1)
    k = pl.program_id(2)
    n_k = pl.num_programs(2)
    tm = a_ref.shape[0]
    tk = a_ref.shape[1]

    cur = jax.lax.rem(l, 2)       # ping-pong slot holding emb_l (valid for l >= 1)
    nxt = jax.lax.rem(l + 1, 2)   # slot being built: emb_{l+1}

    rows = pl.ds(pl.multiple_of(i * tm, tm), tm)
    cols = pl.ds(pl.multiple_of(k * tk, tk), tk)

    # Fresh per-row-tile f32 accumulator for the k reduction (no RMW into the big
    # dynamically indexed scratch on every k step).
    @pl.when(k == 0)
    def _():
        acc_tile[...] = jnp.zeros_like(acc_tile)

    # Layer 0 sources emb_0 straight from the streamed bf16 input; later layers source
    # the bf16 ping-pong slot.  Both are bf16 MXU matmuls with f32 accumulation.
    @pl.when(l == 0)
    def _():
        acc_tile[...] += jnp.dot(a_ref[...], emb0_ref[...],
                                 preferred_element_type=jnp.float32)

    @pl.when(l > 0)
    def _():
        acc_tile[...] += jnp.dot(a_ref[...], emb_pp[cur, cols, :],
                                 preferred_element_type=jnp.float32)

    # After the last k tile, this row tile of emb_{l+1} is complete: stash it in bf16
    # for the next layer, fold it into the running layer sum, and emit the lane-dense
    # output tile (earlier layers write partial sums that the final layer's visit of
    # the same block overwrites; the extra HBM writes are noise next to the A stream).
    @pl.when(k == n_k - 1)
    def _():
        tile_f32 = acc_tile[...]
        emb_pp[nxt, rows, :] = tile_f32.astype(jnp.bfloat16)
        prev = jnp.where(l > 0, acc[rows, :], 0.0)
        new_sum = prev + tile_f32
        acc[rows, :] = new_sum
        out_ref[...] = new_sum


def build_normalized_adjacency(edge_index, num_nodes, padded_size=None):
    """Dense symmetric-normalized adjacency used by LGConv (gcn_norm, no self loops).

    NOTE: degree is computed over dst only; this matches gcn_norm because the
    edge list is explicitly symmetrized by the caller.
    """
    if padded_size is None:
        padded_size = num_nodes
    src, dst = edge_index[0], edge_index[1]
    ones = jnp.ones(src.shape[0], dtype=jnp.float32)
    deg = jnp.zeros((num_nodes,), jnp.float32).at[dst].add(ones)
    deg_inv_sqrt = jnp.where(deg > 0, 1.0 / jnp.sqrt(deg), 0.0)
    norm = deg_inv_sqrt[src] * deg_inv_sqrt[dst]
    a = jnp.zeros((padded_size, padded_size), jnp.float32)
    a = a.at[dst, src].add(norm)          # out[dst] += norm * x[src]
    return a


def lightgcn_plus0_forward(edge_index, emb_users_w, emb_items_w,
                           users_features, items_features,
                           user_proj, item_proj,
                           num_layers=NUM_LAYERS, tile=1024):
    num_users, emb_dim = emb_users_w.shape
    num_items = emb_items_w.shape[0]
    num_nodes = num_users + num_items

    # (8, 128)-aligned, lane-dense layouts.
    tile = max(128, min(_round_up(tile, 128), _round_up(num_nodes, 128)))
    n_pad = _round_up(num_nodes, tile)
    d_pad = _round_up(emb_dim, 128)

    # Adjacency in bf16: streamed once per layer; dominates HBM traffic.
    a_norm = build_normalized_adjacency(edge_index, num_nodes, n_pad).astype(jnp.bfloat16)

    emb0 = jnp.zeros((n_pad, d_pad), jnp.float32)
    emb0 = emb0.at[:num_users, :emb_dim].set(emb_users_w)
    emb0 = emb0.at[num_users:num_nodes, :emb_dim].set(emb_items_w)
    # The kernel only consumes emb_0 as an MXU operand at layer 0 -> stream it as bf16.
    emb0_bf16 = emb0.astype(jnp.bfloat16)

    grid = (num_layers, n_pad // tile, n_pad // tile)

    # emb_0 is only needed at layer 0; freeze its block index afterwards so the
    # pipeline does not re-fetch it every step for l > 0.
    def emb0_map(l, i, k):
        return (jnp.where(l == 0, k, 0), 0)

    layer_sum = pl.pallas_call(
        lightgcn_kernel,
        out_shape=jax.ShapeDtypeStruct((n_pad, d_pad), jnp.float32),
        grid_spec=pltpu.PrefetchScalarGridSpec(
            num_scalar_prefetch=0,
            grid=grid,
            in_specs=[
                pl.BlockSpec((tile, d_pad), emb0_map),               # emb_0 (bf16 stream)
                pl.BlockSpec((tile, tile), lambda l, i, k: (i, k)),  # A tiles (bf16 stream)
            ],
            out_specs=pl.BlockSpec((tile, d_pad), lambda l, i, k: (i, 0)),
            scratch_shapes=[
                pltpu.VMEM((2, n_pad, d_pad), jnp.bfloat16),  # emb_l / emb_{l+1} ping-pong
                pltpu.VMEM((n_pad, d_pad), jnp.float32),      # running sum of emb_1..emb_L
                pltpu.VMEM((tile, d_pad), jnp.float32),       # per-row-tile k accumulator
            ],
        ),
        compiler_params=pltpu.CompilerParams(
            # Layer recurrence / k reduction / shared resident scratch -> all serial.
            dimension_semantics=("arbitrary", "arbitrary", "arbitrary"),
            vmem_limit_bytes=_vmem_limit_bytes(),
        ),
    )(emb0_bf16, a_norm)

    # emb_final = 1/(L+1) * mean(emb_0..emb_L) = (emb_0 + sum_{l>=1} emb_l) / (L+1)^2.
    # emb_0 contribution, scaling and the precomputed feature projections are cheap
    # elementwise / tiny-matmul work that XLA fuses here (frees resident VMEM slabs).
    scale = 1.0 / float((num_layers + 1) ** 2)
    emb_final = (emb0 + layer_sum) * scale

    users_out = emb_final[:num_users, :emb_dim] + users_features @ user_proj
    items_out = emb_final[num_users:num_nodes, :emb_dim] + items_features @ item_proj
    return users_out, items_out


def reference_forward(edge_index, emb_users_w, emb_items_w,
                      users_features, items_features,
                      user_proj, item_proj, num_layers=NUM_LAYERS):
    """Pure-JAX reference of LightGCNPlus0.forward."""
    num_users = emb_users_w.shape[0]
    num_items = emb_items_w.shape[0]
    n = num_users + num_items
    a = build_normalized_adjacency(edge_index, n)
    emb = jnp.concatenate([emb_users_w, emb_items_w], axis=0)
    acc = emb
    for _ in range(num_layers):
        emb = a @ emb
        acc = acc + emb
    final = acc / float((num_layers + 1) ** 2)   # 1/(L+1) * mean over (L+1) layers
    return (final[:num_users] + users_features @ user_proj,
            final[num_users:] + items_features @ item_proj)


if __name__ == "__main__":
    key = jax.random.PRNGKey(0)
    num_users, num_items = 8, 8
    emb_dim = 32
    user_feat_dim, item_feat_dim = 6, 10

    k1, k2, k3, k4, k5, k6, k7 = jax.random.split(key, 7)

    emb_users_w = jax.random.normal(k1, (num_users, emb_dim), jnp.float32)
    emb_items_w = jax.random.normal(k2, (num_items, emb_dim), jnp.float32)
    users_features = jax.random.normal(k3, (num_users, user_feat_dim), jnp.float32)
    items_features = jax.random.normal(k4, (num_items, item_feat_dim), jnp.float32)
    # user_proj / item_proj are plain (F, D) tensors in the reference module
    user_proj = 0.1 * jax.random.normal(k6, (user_feat_dim, emb_dim), jnp.float32)
    item_proj = 0.1 * jax.random.normal(k7, (item_feat_dim, emb_dim), jnp.float32)

    # bipartite user-item interactions, symmetrized; users = [0, U), items = [U, U+I)
    edges_per_user = 3
    item_choice = jax.random.randint(k5, (num_users, edges_per_user), 0, num_items)
    src_u = jnp.repeat(jnp.arange(num_users), edges_per_user)
    dst_i = item_choice.reshape(-1) + num_users
    src = jnp.concatenate([src_u, dst_i])
    dst = jnp.concatenate([dst_i, src_u])
    edge_index = jnp.stack([src, dst]).astype(jnp.int32)   # (2, E)

    out_users, out_items = lightgcn_plus0_forward(
        edge_index, emb_users_w, emb_items_w,
        users_features, items_features, user_proj, item_proj)
    jax.block_until_ready((out_users, out_items))

    ref_users, ref_items = reference_forward(
        edge_index, emb_users_w, emb_items_w,
        users_features, items_features, user_proj, item_proj)

    assert out_users.shape == (num_users, emb_dim)
    assert out_items.shape == (num_items, emb_dim)
    assert jnp.allclose(out_users, ref_users, rtol=3e-2, atol=3e-2), (
        float(jnp.max(jnp.abs(out_users - ref_users))))
    assert jnp.allclose(out_items, ref_items, rtol=3e-2, atol=3e-2), (
        float(jnp.max(jnp.abs(out_items - ref_items))))
    print("KERNEL_OK")
</pallas_src>

<mosaic_0001>
module attributes {stable_mosaic.version = 11 : i64} {
  func.func @lightgcn_kernel(%arg0: i32, %arg1: i32, %arg2: i32, %arg3: memref<128x128xbf16, #tpu.memory_space<vmem>>, %arg4: memref<128x128xbf16, #tpu.memory_space<vmem>>, %arg5: memref<128x128xf32, #tpu.memory_space<vmem>>, %arg6: memref<2x128x128xbf16, #tpu.memory_space<vmem>>, %arg7: memref<128x128xf32, #tpu.memory_space<vmem>>, %arg8: memref<128x128xf32, #tpu.memory_space<vmem>>) attributes {dimension_semantics = [#tpu.dimension_semantics<arbitrary>, #tpu.dimension_semantics<arbitrary>, #tpu.dimension_semantics<arbitrary>], iteration_bounds = array<i64: 4, 1, 1>, scalar_prefetch = 0 : i64, scratch_operands = 3 : i64, tpu.core_type = #tpu.core_type<tc>, window_params = [{transform_indices = @transform_0, window_bounds = array<i64: 128, 128>}, {transform_indices = @transform_1, window_bounds = array<i64: 128, 128>}, {transform_indices = @transform_2, window_bounds = array<i64: 128, 128>}]} {
    %c2_i32 = arith.constant 2 : i32
    %0 = arith.remsi %arg0, %c2_i32 : i32
    %c1_i32 = arith.constant 1 : i32
    %1 = arith.addi %arg0, %c1_i32 : i32
    %c2_i32_0 = arith.constant 2 : i32
    %2 = arith.remsi %1, %c2_i32_0 : i32
    %c128_i32 = arith.constant 128 : i32
    %3 = arith.muli %arg1, %c128_i32 : i32
    %4 = tpu.assume_multiple %3, 128 : i32
    %c128_i32_1 = arith.constant 128 : i32
    %5 = arith.muli %arg2, %c128_i32_1 : i32
    %6 = tpu.assume_multiple %5, 128 : i32
    %c0_i32 = arith.constant 0 : i32
    %7 = arith.cmpi eq, %arg2, %c0_i32 : i32
    %8 = arith.extui %7 : i1 to i32
    %c0_i32_2 = arith.constant 0 : i32
    %9 = arith.cmpi ne, %8, %c0_i32_2 : i32
    scf.if %9 {
      %cst = arith.constant 0.000000e+00 : f32
      %19 = vector.broadcast %cst : f32 to vector<128x128xf32>
      %c0 = arith.constant 0 : index
      %c0_9 = arith.constant 0 : index
      %20 = vector.load %arg8[%c0, %c0_9] : memref<128x128xf32, #tpu.memory_space<vmem>>, vector<128x128xf32>
      tpu.vector_store %arg8[%c0, %c0_9], %19 {strides = array<i32>} : memref<128x128xf32, #tpu.memory_space<vmem>>, vector<128x128xf32>,
    } else {
    }
    %c0_i32_3 = arith.constant 0 : i32
    %10 = arith.cmpi eq, %arg0, %c0_i32_3 : i32
    %11 = arith.extui %10 : i1 to i32
    %c0_i32_4 = arith.constant 0 : i32
    %12 = arith.cmpi ne, %11, %c0_i32_4 : i32
    scf.if %12 {
      %c0 = arith.constant 0 : index
      %c0_9 = arith.constant 0 : index
      %19 = vector.load %arg8[%c0, %c0_9] : memref<128x128xf32, #tpu.memory_space<vmem>>, vector<128x128xf32>
      %c0_10 = arith.constant 0 : index
      %c0_11 = arith.constant 0 : index
      %20 = vector.load %arg4[%c0_10, %c0_11] : memref<128x128xbf16, #tpu.memory_space<vmem>>, vector<128x128xbf16>
      %c0_12 = arith.constant 0 : index
      %c0_13 = arith.constant 0 : index
      %21 = vector.load %arg3[%c0_12, %c0_13] : memref<128x128xbf16, #tpu.memory_space<vmem>>, vector<128x128xbf16>
      %cst = arith.constant dense<0.000000e+00> : vector<128x128xf32>
      %22 = tpu.matmul %20, %21, %cst {dimension_numbers = #tpu.dot_dimension_numbers<[1], [0], [0], [1], [0, 0, 1, 1], [], []>} : vector<128x128xbf16>, vector<128x128xbf16>, vector<128x128xf32> -> vector<128x128xf32>
      %23 = arith.addf %19, %22 : vector<128x128xf32>
      %c0_14 = arith.constant 0 : index
      %c0_15 = arith.constant 0 : index
      %24 = vector.load %arg8[%c0_14, %c0_15] : memref<128x128xf32, #tpu.memory_space<vmem>>, vector<128x128xf32>
      tpu.vector_store %arg8[%c0_14, %c0_15], %23 {strides = array<i32>} : memref<128x128xf32, #tpu.memory_space<vmem>>, vector<128x128xf32>,
    } else {
    }
    %c0_i32_5 = arith.constant 0 : i32
    %13 = arith.cmpi sgt, %arg0, %c0_i32_5 : i32
    %14 = arith.extui %13 : i1 to i32
    %c0_i32_6 = arith.constant 0 : i32
    %15 = arith.cmpi ne, %14, %c0_i32_6 : i32
    scf.if %15 {
      %c0 = arith.constant 0 : index
      %c0_9 = arith.constant 0 : index
      %19 = vector.load %arg8[%c0, %c0_9] : memref<128x128xf32, #tpu.memory_space<vmem>>, vector<128x128xf32>
      %c0_10 = arith.constant 0 : index
      %c0_11 = arith.constant 0 : index
      %20 = vector.load %arg4[%c0_10, %c0_11] : memref<128x128xbf16, #tpu.memory_space<vmem>>, vector<128x128xbf16>
      %21 = arith.index_cast %0 : i32 to index
      %22 = arith.index_cast %6 : i32 to index
      %c0_12 = arith.constant 0 : index
      %23 = vector.load %arg6[%21, %22, %c0_12] : memref<2x128x128xbf16, #tpu.memory_space<vmem>>, vector<1x128x128xbf16>
      %24 = vector.shape_cast %23 : vector<1x128x128xbf16> to vector<128x128xbf16>
      %cst = arith.constant dense<0.000000e+00> : vector<128x128xf32>
      %25 = tpu.matmul %20, %24, %cst {dimension_numbers = #tpu.dot_dimension_numbers<[1], [0], [0], [1], [0, 0, 1, 1], [], []>} : vector<128x128xbf16>, vector<128x128xbf16>, vector<128x128xf32> -> vector<128x128xf32>
      %26 = arith.addf %19, %25 : vector<128x128xf32>
      %c0_13 = arith.constant 0 : index
      %c0_14 = arith.constant 0 : index
      %27 = vector.load %arg8[%c0_13, %c0_14] : memref<128x128xf32, #tpu.memory_space<vmem>>, vector<128x128xf32>
      tpu.vector_store %arg8[%c0_13, %c0_14], %26 {strides = array<i32>} : memref<128x128xf32, #tpu.memory_space<vmem>>, vector<128x128xf32>,
    } else {
    }
    %c0_i32_7 = arith.constant 0 : i32
    %16 = arith.cmpi eq, %arg2, %c0_i32_7 : i32
    %17 = arith.extui %16 : i1 to i32
    %c0_i32_8 = arith.constant 0 : i32
    %18 = arith.cmpi ne, %17, %c0_i32_8 : i32
    scf.if %18 {
      %c0 = arith.constant 0 : index
      %c0_9 = arith.constant 0 : index
      %19 = vector.load %arg8[%c0, %c0_9] : memref<128x128xf32, #tpu.memory_space<vmem>>, vector<128x128xf32>
      %20 = arith.truncf %19 : vector<128x128xf32> to vector<128x128xbf16>
      %21 = arith.index_cast %2 : i32 to index
      %22 = arith.index_cast %4 : i32 to index
      %c0_10 = arith.constant 0 : index
      %23 = vector.load %arg6[%21, %22, %c0_10] : memref<2x128x128xbf16, #tpu.memory_space<vmem>>, vector<1x128x128xbf16>
      %24 = vector.shape_cast %23 : vector<1x128x128xbf16> to vector<128x128xbf16>
      %25 = vector.shape_cast %20 : vector<128x128xbf16> to vector<1x128x128xbf16>
      tpu.vector_store %arg6[%21, %22, %c0_10], %25 {strides = array<i32>} : memref<2x128x128xbf16, #tpu.memory_space<vmem>>, vector<1x128x128xbf16>,
      %c0_i32_11 = arith.constant 0 : i32
      %26 = arith.cmpi sgt, %arg0, %c0_i32_11 : i32
      %27 = arith.index_cast %4 : i32 to index
      %c0_12 = arith.constant 0 : index
      %28 = vector.load %arg7[%27, %c0_12] : memref<128x128xf32, #tpu.memory_space<vmem>>, vector<128x128xf32>
      %cst = arith.constant 0.000000e+00 : f32
      %29 = vector.broadcast %cst : f32 to vector<128x128xf32>
      %30 = arith.select %26, %28, %29 : vector<128x128xf32>
      %31 = arith.addf %30, %19 : vector<128x128xf32>
      %32 = arith.index_cast %4 : i32 to index
      %c0_13 = arith.constant 0 : index
      %33 = vector.load %arg7[%32, %c0_13] : memref<128x128xf32, #tpu.memory_space<vmem>>, vector<128x128xf32>
      tpu.vector_store %arg7[%32, %c0_13], %31 {strides = array<i32>} : memref<128x128xf32, #tpu.memory_space<vmem>>, vector<128x128xf32>,
      %c0_14 = arith.constant 0 : index
      %c0_15 = arith.constant 0 : index
      %34 = vector.load %arg5[%c0_14, %c0_15] : memref<128x128xf32, #tpu.memory_space<vmem>>, vector<128x128xf32>
      tpu.vector_store %arg5[%c0_14, %c0_15], %31 {strides = array<i32>} : memref<128x128xf32, #tpu.memory_space<vmem>>, vector<128x128xf32>,
    } else {
    }
    return
  }
  func.func @transform_0(%arg0: i32, %arg1: i32, %arg2: i32) -> (i32, i32) {
    %c0_i32 = arith.constant 0 : i32
    %0 = arith.cmpi eq, %arg0, %c0_i32 : i32
    %c0_i32_0 = arith.constant 0 : i32
    %1 = arith.select %0, %arg2, %c0_i32_0 : i32
    %c0_i32_1 = arith.constant 0 : i32
    %c0_i32_2 = arith.constant 0 : i32
    return %1, %c0_i32_1 : i32, i32
  }
  func.func @transform_1(%arg0: i32, %arg1: i32, %arg2: i32) -> (i32, i32) {
    %c0_i32 = arith.constant 0 : i32
    return %arg1, %arg2 : i32, i32
  }
  func.func @transform_2(%arg0: i32, %arg1: i32, %arg2: i32) -> (i32, i32) {
    %c0_i32 = arith.constant 0 : i32
    %c0_i32_0 = arith.constant 0 : i32
    return %arg1, %c0_i32 : i32, i32
  }
}

</mosaic_0001>

<llo_original>
// kernel: tpu_custom_call.1
$region0: #{tpu_custom_call.1}
  #allocation0 [shape = 'u32[]', space=smem, size = 0x4, offset = 0x4, fixed_abs, tag = 'smem constant byte address 0x4 - core index']
  #allocation1 [shape = 'u32[144,128]{1,0:T(1,128)}', space=vmem, size = 0x12000, scoped, tag = 'internal scratch']
  #allocation2 [shape = 'bf16[2,128,128]{2,1,0:T(8,128)(2,1)}', space=vmem, size = 0x10000, scoped, tag = 'scratch operand']
  #allocation3 [shape = 'f32[128,128]{1,0:T(8,128)}', space=vmem, size = 0x10000, scoped, tag = 'scratch operand']
  #allocation4 [shape = 'f32[128,128]{1,0:T(8,128)}', space=vmem, size = 0x10000, scoped, tag = 'scratch operand']
  %s0 = inlined_call_operand.hbm [shape: bf16[128,128], index: 0, kind: input, shape index: {}]
  %s1 = inlined_call_operand.hbm [shape: bf16[128,128], index: 1, kind: input, shape index: {}]
  %s2 = inlined_call_operand.hbm [shape: f32[128,128], index: 2, kind: output, shape index: {}]
  %s3 = sld [smem:[#allocation0]]
  $region65: #{tpu_custom_call.1} parent=0
    _
  %s5 = ssub.s32 1, %s3
  %s6 = scalar_select 0, %s5, %s3
  $region1: #{tpu_custom_call.1} parent=0
    #allocation5 [shape = 'u8[65536]{0}', space=vmem, size = 0x10000, scoped, tag = 'input window, operand 0']
    #allocation6 [shape = 's32[2]{0}', space=sflag, size = 0x8, scoped, tag = 'scoped memory for tpu_custom_call.1']
    #allocation7 [shape = 's32[2]{0}', space=sflag, size = 0x8, scoped, tag = 'scoped memory for tpu_custom_call.1']
    #allocation8 [shape = 'u8[32768]{0}', space=vmem, size = 0x8000, scoped, tag = 'input window, operand 1, single buffered']
    #allocation9 [shape = 's32[1]{0}', space=sflag, size = 0x4, scoped, tag = 'scoped memory for tpu_custom_call.1']
    #allocation10 [shape = 'u8[65536]{0}', space=vmem, size = 0x10000, scoped, tag = 'output window, operand 0, single buffered']
    %7 = vsyncpa [#allocation6], 0
    %s8 = scalar_lea.sflag [#allocation6], 1
    %9 = vsyncpa %s8, 0
    %10 = vsyncpa [#allocation9], 0
    %11 = vsyncpa [#allocation7], 0
    loop: start=0, step=1, limit=6
    $region2: #{tpu_custom_call.1} parent=1 // loop_pre_header
      _
    $region3: #{tpu_custom_call.1} parent=1 // loop_header
      %s13 = sphi 0, %s17
      %p14 = scmp.ge.s32.totalorder %s13, 6
      %s20 = sphi 0, %s39
      %s21 = sphi 0, %s35
      %s22 = sphi 0, %s31
      %s23 = sphi 0, %s20
      %s24 = sphi 0, %s21
      %s25 = sphi 0, %s22
      %s26 = sphi 0, %s23
      %s27 = sphi 0, %s24
      %s28 = sphi 0, %s25
      %s46 = sphi 0, %s48
      %s49 = sphi 0, %s46
      %s50 = sphi 0, %s49
      %s66 = sphi 0, %s50
      %s74 = sphi 0, %s76
      %s77 = sphi 0, %s74
      %s78 = sphi 0, %s77
      %s94 = sphi 0, %s78
      %s100 = sphi 0, %s102
      %s103 = sphi 0, %s100
      %s104 = sphi 0, %s103
      %s120 = sphi 0, %s104
    $region4: #{tpu_custom_call.1} parent=1 // loop_header_branch
      %16 = sbr.rel (%p14) target = $region8
    $region5: #{tpu_custom_call.1} parent=1 // loop_body
      %s18 = ssub.s32 %s13, 1
      %s19 = ssub.s32 %s13, 2
      %s29 = sadd.s32 1, %s22
      %p30 = scmp.ge.s32.totalorder %s29, 1
      %s31 = scalar_select %p30, 0, %s29
      %s32 = sadd.s32 1, %s21
      %s33 = scalar_select %p30, %s32, %s21
      %p34 = scmp.ge.s32.totalorder %s33, 1
      %s35 = scalar_select %p34, 0, %s33
      %s36 = sadd.s32 1, %s20
      %s37 = scalar_select %p34, %s36, %s20
      %p38 = scmp.ge.s32.totalorder %s37, 4
      %s39 = scalar_select %p38, 0, %s37
      %p40 = scmp.eq.s32.totalorder %s20, 0
      %s41 = scalar_select %p40, %s22, 0
      %p42 = scmp.eq.s32.totalorder %s39, 0
      %s43 = scalar_select %p42, %s31, 0
      %s44 = ssub.s32 %s41, %s43
      %p45 = scmp.eq.s32.totalorder %s44, 0
      %s47 = sadd.s32 %s46, 1
      %s48 = scalar_select %p45, %s46, %s47
      %p51 = pneg %p45
      %p52 = scmp.eq.s32.totalorder %s13, 3
      %p53 = por %p51, %p52
      %p54 = scmp.ne.s32.totalorder %s46, %s49
      %p55 = scmp.eq.s32.totalorder %s13, 0
      %p56 = por %p54, %p55
      %p57 = scmp.ne.s32.totalorder %s46, %s49
      %p58 = scmp.eq.s32.totalorder %s18, 3
      %p59 = por %p57, %p58
      %p60 = scmp.ne.s32.totalorder %s49, %s50
      %p61 = scmp.eq.s32.totalorder %s18, 0
      %p62 = por %p60, %p61
      %p63 = scmp.ne.s32.totalorder %s49, %s50
      %p64 = scmp.eq.s32.totalorder %s19, 3
      %p65 = por %p63, %p64
      %p67 = scmp.ne.s32.totalorder %s50, %s66
      %p68 = scmp.eq.s32.totalorder %s19, 0
      %p69 = por %p67, %p68
      %s70 = ssub.s32 %s21, %s35
      %s71 = ssub.s32 %s22, %s31
      %s72 = sor.u32 %s70, %s71
      %p73 = scmp.eq.s32.totalorder %s72, 0
      %s75 = sadd.s32 %s74, 1
      %s76 = scalar_select %p73, %s74, %s75
      %p79 = pneg %p73
      %p80 = scmp.eq.s32.totalorder %s13, 3
      %p81 = por %p79, %p80
      %p82 = scmp.ne.s32.totalorder %s74, %s77
      %p83 = scmp.eq.s32.totalorder %s13, 0
      %p84 = por %p82, %p83
      %p85 = scmp.ne.s32.totalorder %s74, %s77
      %p86 = scmp.eq.s32.totalorder %s18, 3
      %p87 = por %p85, %p86
      %p88 = scmp.ne.s32.totalorder %s77, %s78
      %p89 = scmp.eq.s32.totalorder %s18, 0
      %p90 = por %p88, %p89
      %p91 = scmp.ne.s32.totalorder %s77, %s78
      %p92 = scmp.eq.s32.totalorder %s19, 3
      %p93 = por %p91, %p92
      %p95 = scmp.ne.s32.totalorder %s78, %s94
      %p96 = scmp.eq.s32.totalorder %s19, 0
      %p97 = por %p95, %p96
      %s98 = ssub.s32 %s21, %s35
      %p99 = scmp.eq.s32.totalorder %s98, 0
      %s101 = sadd.s32 %s100, 1
      %s102 = scalar_select %p99, %s100, %s101
      %p105 = pneg %p99
      %p106 = scmp.eq.s32.totalorder %s13, 3
      %p107 = por %p105, %p106
      %p108 = scmp.ne.s32.totalorder %s100, %s103
      %p109 = scmp.eq.s32.totalorder %s13, 0
      %p110 = por %p108, %p109
      %p111 = scmp.ne.s32.totalorder %s100, %s103
      %p112 = scmp.eq.s32.totalorder %s18, 3
      %p113 = por %p111, %p112
      %p114 = scmp.ne.s32.totalorder %s103, %s104
      %p115 = scmp.eq.s32.totalorder %s18, 0
      %p116 = por %p114, %p115
      %p117 = scmp.ne.s32.totalorder %s103, %s104
      %p118 = scmp.eq.s32.totalorder %s19, 3
      %p119 = por %p117, %p118
      %p121 = scmp.ne.s32.totalorder %s104, %s120
      %p122 = scmp.eq.s32.totalorder %s19, 0
      %p123 = por %p121, %p122
      %p124 = scmp.le.s32.totalorder 1, %s13
      %p125 = scmp.lt.s32.totalorder %s13, 5
      %p126 = pnand %p124, %p125
      %p127 = pneg %p126
      // Predicated region
      $region9: #{tpu_custom_call.1} parent=5 // pred_check
        _
      $region10: #{tpu_custom_call.1} parent=5 // pred_check_branch
        %129 = sbr.rel (%p126) target = $region12
      $region11: #{tpu_custom_call.1} parent=5 // pred_region
        %s130 = ssub.s32 %s13, 1
        // Predicated region
        $region13: #{tpu_custom_call.1} parent=11 // pred_check
          %p131 = pneg %p90
        $region14: #{tpu_custom_call.1} parent=11 // pred_check_branch
          %133 = sbr.rel (%p131) target = $region16
        $region15: #{tpu_custom_call.1} parent=11 // pred_region
          %s134 = smul.u32 16, %s24
          %s136 = ssub.s32 1024, 1024
          %137 = vsyncadd [#allocation9], %s136
          %s138 = sadd.s32 %s25, %s134
          %s139 = smul.addr %s138, 64
          %s140 = scalar_lea.hbm %s1, %s139
          %s141 = sshll.u32 [#allocation8], 4
          %s142 = int_to_ptr.vmem [resolvable:$true] %s141
          %147 = dma.hbm_to_vmem [thread:$0]  %s140, 1024, %s142, [#allocation9], 64, 64, 4
        $region16: #{tpu_custom_call.1} parent=11 // pred_fallthru
          _
      $region12: #{tpu_custom_call.1} parent=5 // pred_fallthru
        _
      %p148 = scmp.lt.s32.totalorder %s13, 4
      // Predicated region
      $region17: #{tpu_custom_call.1} parent=5 // pred_check
        %p149 = pneg %p148
      $region18: #{tpu_custom_call.1} parent=5 // pred_check_branch
        %151 = sbr.rel (%p149) target = $region20
      $region19: #{tpu_custom_call.1} parent=5 // pred_region
        // Predicated region
        $region21: #{tpu_custom_call.1} parent=19 // pred_check
          %p152 = pneg %p56
        $region22: #{tpu_custom_call.1} parent=19 // pred_check_branch
          %154 = sbr.rel (%p152) target = $region24
        $region23: #{tpu_custom_call.1} parent=19 // pred_region
          %s155 = sand.u32 %s46, 1
          %s156 = scalar_lea.sflag [#allocation6], %s155
          %s157 = sand.u32 %s46, 1
          %s158 = smul.addr %s157, 64
          %s159 = scalar_lea.vmem [#allocation5], %s158
          %p160 = scmp.eq.s32.totalorder %s20, 0
          %s161 = scalar_select %p160, %s22, 0
          %s162 = smul.u32 16, %s161
          %s164 = ssub.s32 1024, 1024
          %165 = vsyncadd %s156, %s164
          %s166 = smul.addr %s162, 64
          %s167 = scalar_lea.hbm %s0, %s166
          %s168 = sshll.u32 %s159, 4
          %s169 = int_to_ptr.vmem [resolvable:$true] %s168
          %174 = dma.hbm_to_vmem [thread:$0]  %s167, 1024, %s169, %s156, 64, 64, 4
        $region24: #{tpu_custom_call.1} parent=19 // pred_fallthru
          _
      $region20: #{tpu_custom_call.1} parent=5 // pred_fallthru
        _
      %p175 = scmp.le.s32.totalorder 1, %s13
      %p176 = scmp.lt.s32.totalorder %s13, 5
      %p177 = pnand %p175, %p176
      %p178 = pneg %p177
      // Predicated region
      $region25: #{tpu_custom_call.1} parent=5 // pred_check
        _
      $region26: #{tpu_custom_call.1} parent=5 // pred_check_branch
        %180 = sbr.rel (%p177) target = $region28
      $region27: #{tpu_custom_call.1} parent=5 // pred_region
        %s181 = ssub.s32 %s13, 1
        %s182 = sand.u32 %s49, 1
        %s183 = scalar_lea.sflag [#allocation6], %s182
        %s184 = sand.u32 %s49, 1
        %s185 = smul.addr %s184, 64
        %s186 = scalar_lea.vmem [#allocation5], %s185
        // Predicated region
        $region29: #{tpu_custom_call.1} parent=27 // pred_check
          %p187 = pneg %p62
        $region30: #{tpu_custom_call.1} parent=27 // pred_check_branch
          %189 = sbr.rel (%p187) target = $region32
        $region31: #{tpu_custom_call.1} parent=27 // pred_region
          %190 = dma.done %s183, 1024
        $region32: #{tpu_custom_call.1} parent=27 // pred_fallthru
          _
        // Predicated region
        $region33: #{tpu_custom_call.1} parent=27 // pred_check
          %p191 = pneg %p90
        $region34: #{tpu_custom_call.1} parent=27 // pred_check_branch
          %193 = sbr.rel (%p191) target = $region36
        $region35: #{tpu_custom_call.1} parent=27 // pred_region
          %194 = dma.done [#allocation9], 1024
        $region36: #{tpu_custom_call.1} parent=27 // pred_fallthru
          _
        %s195 = sand.u32 %s49, 1
        %s196 = scalar_lea.sflag [#allocation6], %s195
        %s197 = sand.u32 %s49, 1
        %s198 = smul.addr %s197, 64
        %s199 = scalar_lea.vmem [#allocation5], %s198
        %p200 = pneg %p62
        %p201 = pneg %p59
        %p202 = pneg %p90
        %p203 = pneg %p87
        %p204 = pneg %p116
        %p205 = pneg %p113
        %p206 = scmp.eq.s32.totalorder %s23, 0
        %s207 = scalar_select %p206, %s25, 0
        %s208 = smul.u32 16, %s207
        %s209 = smul.u32 16, %s24
        %s210 = smul.u32 16, %s24
        %p212 = scmp.lt.s32.totalorder %s23, 0
        %s213 = ssub.s32 0, %s23
        %s214 = scalar_select %p212, %s213, %s23
        %s215 = sand.u32 %s214, 1
        %s216 = ssub.s32 0, %s215
        %s217 = scalar_select %p212, %s216, %s215
        %s218 = sadd.s32 %s23, 1
        %p219 = scmp.lt.s32.totalorder %s218, 0
        %s220 = ssub.s32 0, %s218
        %s221 = scalar_select %p219, %s220, %s218
        %s222 = sand.u32 %s221, 1
        %s223 = ssub.s32 0, %s222
        %s224 = scalar_select %p219, %s223, %s222
        %s225 = smul.u32 %s24, 128
        %s226 = smul.u32 %s25, 128
        %p227 = scmp.eq.s32.totalorder %s25, 0
        // Predicated region
        $region37: #{tpu_custom_call.1} parent=27 // pred_check
          %p228 = pneg %p227
        $region38: #{tpu_custom_call.1} parent=27 // pred_check_branch
          %230 = sbr.rel (%p228) target = $region40
        $region39: #{tpu_custom_call.1} parent=27 // pred_region
          %231 = vst [vmem:[#allocation4] sm:$0xff] 0.0
          %232 = vst [vmem:[#allocation4 + $0x8] sm:$0xff] 0.0
          %233 = vst [vmem:[#allocation4 + $0x10] sm:$0xff] 0.0
          %234 = vst [vmem:[#allocation4 + $0x18] sm:$0xff] 0.0
          %235 = vst [vmem:[#allocation4 + $0x20] sm:$0xff] 0.0
          %236 = vst [vmem:[#allocation4 + $0x28] sm:$0xff] 0.0
          %237 = vst [vmem:[#allocation4 + $0x30] sm:$0xff] 0.0
          %238 = vst [vmem:[#allocation4 + $0x38] sm:$0xff] 0.0
          %239 = vst [vmem:[#allocation4 + $0x40] sm:$0xff] 0.0
          %240 = vst [vmem:[#allocation4 + $0x48] sm:$0xff] 0.0
          %241 = vst [vmem:[#allocation4 + $0x50] sm:$0xff] 0.0
          %242 = vst [vmem:[#allocation4 + $0x58] sm:$0xff] 0.0
          %243 = vst [vmem:[#allocation4 + $0x60] sm:$0xff] 0.0
          %244 = vst [vmem:[#allocation4 + $0x68] sm:$0xff] 0.0
          %245 = vst [vmem:[#allocation4 + $0x70] sm:$0xff] 0.0
          %246 = vst [vmem:[#allocation4 + $0x78] sm:$0xff] 0.0
        $region40: #{tpu_custom_call.1} parent=27 // pred_fallthru
          _
        %p247 = scmp.eq.s32.totalorder %s23, 0
        // Predicated region
        $region41: #{tpu_custom_call.1} parent=27 // pred_check
          %p248 = pneg %p247
        $region42: #{tpu_custom_call.1} parent=27 // pred_check_branch
          %250 = sbr.rel (%p248) target = $region44
        $region43: #{tpu_custom_call.1} parent=27 // pred_region
          %v251 = vld [vmem:[#allocation4] sm:$0xff]
          %v252 = vld [vmem:[#allocation4 + $0x8] sm:$0xff]
          %v253 = vld [vmem:[#allocation4 + $0x10] sm:$0xff]
          %v254 = vld [vmem:[#allocation4 + $0x18] sm:$0xff]
          %v255 = vld [vmem:[#allocation4 + $0x20] sm:$0xff]
          %v256 = vld [vmem:[#allocation4 + $0x28] sm:$0xff]
          %v257 = vld [vmem:[#allocation4 + $0x30] sm:$0xff]
          %v258 = vld [vmem:[#allocation4 + $0x38] sm:$0xff]
          %v259 = vld [vmem:[#allocation4 + $0x40] sm:$0xff]
          %v260 = vld [vmem:[#allocation4 + $0x48] sm:$0xff]
          %v261 = vld [vmem:[#allocation4 + $0x50] sm:$0xff]
          %v262 = vld [vmem:[#allocation4 + $0x58] sm:$0xff]
          %v263 = vld [vmem:[#allocation4 + $0x60] sm:$0xff]
          %v264 = vld [vmem:[#allocation4 + $0x68] sm:$0xff]
          %v265 = vld [vmem:[#allocation4 + $0x70] sm:$0xff]
          %v266 = vld [vmem:[#allocation4 + $0x78] sm:$0xff]
          %v267 = vld [vmem:[#allocation8] sm:$0xf]
          %v268 = vld [vmem:[#allocation8 + $0x4] sm:$0xf]
          %v269 = vld [vmem:[#allocation8 + $0x8] sm:$0xf]
          %v270 = vld [vmem:[#allocation8 + $0xc] sm:$0xf]
          %v271 = vld [vmem:[#allocation8 + $0x10] sm:$0xf]
          %v272 = vld [vmem:[#allocation8 + $0x14] sm:$0xf]
          %v273 = vld [vmem:[#allocation8 + $0x18] sm:$0xf]
          %v274 = vld [vmem:[#allocation8 + $0x1c] sm:$0xf]
          %v275 = vld [vmem:[#allocation8 + $0x20] sm:$0xf]
          %v276 = vld [vmem:[#allocation8 + $0x24] sm:$0xf]
          %v277 = vld [vmem:[#allocation8 + $0x28] sm:$0xf]
          %v278 = vld [vmem:[#allocation8 + $0x2c] sm:$0xf]
          %v279 = vld [vmem:[#allocation8 + $0x30] sm:$0xf]
          %v280 = vld [vmem:[#allocation8 + $0x34] sm:$0xf]
          %v281 = vld [vmem:[#allocation8 + $0x38] sm:$0xf]
          %v282 = vld [vmem:[#allocation8 + $0x3c] sm:$0xf]
          %v283 = vld [vmem:[%s186] sm:$0xf]
          %v284 = vld [vmem:[%s186 + $0x4] sm:$0xf]
          %v285 = vld [vmem:[%s186 + $0x8] sm:$0xf]
          %v286 = vld [vmem:[%s186 + $0xc] sm:$0xf]
          %v287 = vld [vmem:[%s186 + $0x10] sm:$0xf]
          %v288 = vld [vmem:[%s186 + $0x14] sm:$0xf]
          %v289 = vld [vmem:[%s186 + $0x18] sm:$0xf]
          %v290 = vld [vmem:[%s186 + $0x1c] sm:$0xf]
          %v291 = vld [vmem:[%s186 + $0x20] sm:$0xf]
          %v292 = vld [vmem:[%s186 + $0x24] sm:$0xf]
          %v293 = vld [vmem:[%s186 + $0x28] sm:$0xf]
          %v294 = vld [vmem:[%s186 + $0x2c] sm:$0xf]
          %v295 = vld [vmem:[%s186 + $0x30] sm:$0xf]
          %v296 = vld [vmem:[%s186 + $0x34] sm:$0xf]
          %v297 = vld [vmem:[%s186 + $0x38] sm:$0xf]
          %v298 = vld [vmem:[%s186 + $0x3c] sm:$0xf]
          %v315 = vunpack.c.l.b16 %v267
          %v316 = vunpack.c.l.b16 %v268
          %v317 = vunpack.c.l.b16 %v269
          %v318 = vunpack.c.l.b16 %v270
          %v319 = vunpack.c.l.b16 %v271
          %v320 = vunpack.c.l.b16 %v272
          %v321 = vunpack.c.l.b16 %v273
          %v322 = vunpack.c.l.b16 %v274
          %v323 = vunpack.c.l.b16 %v275
          %v324 = vunpack.c.l.b16 %v276
          %v325 = vunpack.c.l.b16 %v277
          %v326 = vunpack.c.l.b16 %v278
          %v327 = vunpack.c.l.b16 %v279
          %v328 = vunpack.c.l.b16 %v280
          %v329 = vunpack.c.l.b16 %v281
          %v330 = vunpack.c.l.b16 %v282
          %v331 = vpack.c.b16 %v316, %v315
          %v332 = vpack.c.b16 %v318, %v317
          %v333 = vpack.c.b16 %v320, %v319
          %v334 = vpack.c.b16 %v322, %v321
          %v335 = vpack.c.b16 %v324, %v323
          %v336 = vpack.c.b16 %v326, %v325
          %v337 = vpack.c.b16 %v328, %v327
          %v338 = vpack.c.b16 %v330, %v329
          %v363 = vunpack.c.l.b16 %v283
          %v364 = vunpack.c.l.b16 %v284
          %v365 = vunpack.c.l.b16 %v285
          %v366 = vunpack.c.l.b16 %v286
          %v367 = vunpack.c.l.b16 %v287
          %v368 = vunpack.c.l.b16 %v288
          %v369 = vunpack.c.l.b16 %v289
          %v370 = vunpack.c.l.b16 %v290
          %v371 = vunpack.c.l.b16 %v291
          %v372 = vunpack.c.l.b16 %v292
          %v373 = vunpack.c.l.b16 %v293
          %v374 = vunpack.c.l.b16 %v294
          %v375 = vunpack.c.l.b16 %v295
          %v376 = vunpack.c.l.b16 %v296
          %v377 = vunpack.c.l.b16 %v297
          %v378 = vunpack.c.l.b16 %v298
          %v379 = vpack.c.b16 %v364, %v363
          %v380 = vpack.c.b16 %v366, %v365
          %v381 = vpack.c.b16 %v368, %v367
          %v382 = vpack.c.b16 %v370, %v369
          %v383 = vpack.c.b16 %v372, %v371
          %v384 = vpack.c.b16 %v374, %v373
          %v385 = vpack.c.b16 %v376, %v375
          %v386 = vpack.c.b16 %v378, %v377
          %395 = vmatprep.subr.bf16.mxu0 0
          %396 = vmatpush1.bf16.msra.mxu0 %v386
          %397 = vmatprep.subr.bf16.mxu0 0
          %398 = vmatpush1.bf16.msra.mxu0 %v385
          %399 = vmatprep.subr.bf16.mxu0 0
          %400 = vmatpush1.bf16.msra.mxu0 %v384
          %401 = vmatprep.subr.bf16.mxu0 0
          %402 = vmatpush1.bf16.msra.mxu0 %v383
          %403 = vmatprep.subr.bf16.mxu0 0
          %404 = vmatpush1.bf16.msra.mxu0 %v382
          %405 = vmatprep.subr.bf16.mxu0 0
          %406 = vmatpush1.bf16.msra.mxu0 %v381
          %407 = vmatprep.subr.bf16.mxu0 0
          %408 = vmatpush1.bf16.msra.mxu0 %v380
          %409 = vmatprep.subr.bf16.mxu0 0
          %410 = vmatpush1.bf16.msra.mxu0 %v379
          %411 = vmatprep.subr.bf16.mxu0 0
          %412 = vmatpush2.bf16.msra.mxu0 0
          %413 = vmatprep.subr.bf16.mxu0 0
          %414 = vmatpush2.bf16.msra.mxu0 0
          %415 = vmatprep.subr.bf16.mxu0 0
          %416 = vmatpush2.bf16.msra.mxu0 0
          %417 = vmatprep.subr.bf16.mxu0 0
          %418 = vmatpush2.bf16.msra.mxu0 0
          %419 = vmatprep.subr.bf16.mxu0 0
          %420 = vmatpush2.bf16.msra.mxu0 0
          %421 = vmatprep.subr.bf16.mxu0 0
          %422 = vmatpush2.bf16.msra.mxu0 0
          %423 = vmatprep.subr.bf16.mxu0 0
          %424 = vmatpush2.bf16.msra.mxu0 0
          %425 = vmatprep.subr.bf16.mxu0 0
          %426 = vmatpush2.bf16.msra.mxu0 0
          %427 = vmatprep.mubr.bf16.mxu0 0
          %428 = vmatmul.mubr.bf16.gmra.mxu0 %v331
          %v429 = vpop.f32.mrf.mxu0
          %v430 = vadd.f32 0.0, %v429
          %v431 = vpop.f32.mrf.mxu0
          %v432 = vpop.f32.mrf.mxu0
          %v433 = vadd.f32 0.0, %v432
          %v434 = vpop.f32.mrf.mxu0
          %435 = vmatprep.mubr.bf16.mxu0 0
          %436 = vmatmul.mubr.bf16.gmra.mxu0 %v332
          %v437 = vpop.f32.mrf.mxu0
          %v438 = vadd.f32 0.0, %v437
          %v439 = vpop.f32.mrf.mxu0
          %v440 = vpop.f32.mrf.mxu0
          %v441 = vadd.f32 0.0, %v440
          %v442 = vpop.f32.mrf.mxu0
          %443 = vmatprep.mubr.bf16.mxu0 0
          %444 = vmatmul.mubr.bf16.gmra.mxu0 %v333
          %v445 = vpop.f32.mrf.mxu0
          %v446 = vadd.f32 0.0, %v445
          %v447 = vpop.f32.mrf.mxu0
          %v448 = vpop.f32.mrf.mxu0
          %v449 = vadd.f32 0.0, %v448
          %v450 = vpop.f32.mrf.mxu0
          %451 = vmatprep.mubr.bf16.mxu0 0
          %452 = vmatmul.mubr.bf16.gmra.mxu0 %v334
          %v453 = vpop.f32.mrf.mxu0
          %v454 = vadd.f32 0.0, %v453
          %v455 = vpop.f32.mrf.mxu0
          %v456 = vpop.f32.mrf.mxu0
          %v457 = vadd.f32 0.0, %v456
          %v458 = vpop.f32.mrf.mxu0
          %459 = vmatprep.mubr.bf16.mxu0 0
          %460 = vmatmul.mubr.bf16.gmra.mxu0 %v335
          %v461 = vpop.f32.mrf.mxu0
          %v462 = vadd.f32 0.0, %v461
          %v463 = vpop.f32.mrf.mxu0
          %v464 = vpop.f32.mrf.mxu0
          %v465 = vadd.f32 0.0, %v464
          %v466 = vpop.f32.mrf.mxu0
          %467 = vmatprep.mubr.bf16.mxu0 0
          %468 = vmatmul.mubr.bf16.gmra.mxu0 %v336
          %v469 = vpop.f32.mrf.mxu0
          %v470 = vadd.f32 0.0, %v469
          %v471 = vpop.f32.mrf.mxu0
          %v472 = vpop.f32.mrf.mxu0
          %v473 = vadd.f32 0.0, %v472
          %v474 = vpop.f32.mrf.mxu0
          %475 = vmatprep.mubr.bf16.mxu0 0
          %476 = vmatmul.mubr.bf16.gmra.mxu0 %v337
          %v477 = vpop.f32.mrf.mxu0
          %v478 = vadd.f32 0.0, %v477
          %v479 = vpop.f32.mrf.mxu0
          %v480 = vpop.f32.mrf.mxu0
          %v481 = vadd.f32 0.0, %v480
          %v482 = vpop.f32.mrf.mxu0
          %483 = vmatprep.mubr.bf16.mxu0 0
          %484 = vmatmul.mubr.bf16.gmra.mxu0 %v338
          %v485 = vpop.f32.mrf.mxu0
          %v486 = vadd.f32 0.0, %v485
          %v487 = vpop.f32.mrf.mxu0
          %v488 = vpop.f32.mrf.mxu0
          %v489 = vadd.f32 0.0, %v488
          %v490 = vpop.f32.mrf.mxu0
          %491 = vdwg.mxu0
          %v492 = vadd.f32 %v251, %v430
          %v493 = vadd.f32 %v252, %v433
          %v494 = vadd.f32 %v253, %v438
          %v495 = vadd.f32 %v254, %v441
          %v496 = vadd.f32 %v255, %v446
          %v497 = vadd.f32 %v256, %v449
          %v498 = vadd.f32 %v257, %v454
          %v499 = vadd.f32 %v258, %v457
          %v500 = vadd.f32 %v259, %v462
          %v501 = vadd.f32 %v260, %v465
          %v502 = vadd.f32 %v261, %v470
          %v503 = vadd.f32 %v262, %v473
          %v504 = vadd.f32 %v263, %v478
          %v505 = vadd.f32 %v264, %v481
          %v506 = vadd.f32 %v265, %v486
          %v507 = vadd.f32 %v266, %v489
          %508 = vst [vmem:[#allocation4] sm:$0xff] %v492
          %509 = vst [vmem:[#allocation4 + $0x8] sm:$0xff] %v493
          %510 = vst [vmem:[#allocation4 + $0x10] sm:$0xff] %v494
          %511 = vst [vmem:[#allocation4 + $0x18] sm:$0xff] %v495
          %512 = vst [vmem:[#allocation4 + $0x20] sm:$0xff] %v496
          %513 = vst [vmem:[#allocation4 + $0x28] sm:$0xff] %v497
          %514 = vst [vmem:[#allocation4 + $0x30] sm:$0xff] %v498
          %515 = vst [vmem:[#allocation4 + $0x38] sm:$0xff] %v499
          %516 = vst [vmem:[#allocation4 + $0x40] sm:$0xff] %v500
          %517 = vst [vmem:[#allocation4 + $0x48] sm:$0xff] %v501
          %518 = vst [vmem:[#allocation4 + $0x50] sm:$0xff] %v502
          %519 = vst [vmem:[#allocation4 + $0x58] sm:$0xff] %v503
          %520 = vst [vmem:[#allocation4 + $0x60] sm:$0xff] %v504
          %521 = vst [vmem:[#allocation4 + $0x68] sm:$0xff] %v505
          %522 = vst [vmem:[#allocation4 + $0x70] sm:$0xff] %v506
          %523 = vst [vmem:[#allocation4 + $0x78] sm:$0xff] %v507
        $region44: #{tpu_custom_call.1} parent=27 // pred_fallthru
          _
        %p524 = scmp.gt.s32.totalorder %s23, 0
        // Predicated region
        $region45: #{tpu_custom_call.1} parent=27 // pred_check
          %p525 = pneg %p524
        $region46: #{tpu_custom_call.1} parent=27 // pred_check_branch
          %527 = sbr.rel (%p525) target = $region48
        $region47: #{tpu_custom_call.1} parent=27 // pred_region
          %v528 = vld [vmem:[#allocation4] sm:$0xff]
          %v529 = vld [vmem:[#allocation4 + $0x8] sm:$0xff]
          %v530 = vld [vmem:[#allocation4 + $0x10] sm:$0xff]
          %v531 = vld [vmem:[#allocation4 + $0x18] sm:$0xff]
          %v532 = vld [vmem:[#allocation4 + $0x20] sm:$0xff]
          %v533 = vld [vmem:[#allocation4 + $0x28] sm:$0xff]
          %v534 = vld [vmem:[#allocation4 + $0x30] sm:$0xff]
          %v535 = vld [vmem:[#allocation4 + $0x38] sm:$0xff]
          %v536 = vld [vmem:[#allocation4 + $0x40] sm:$0xff]
          %v537 = vld [vmem:[#allocation4 + $0x48] sm:$0xff]
          %v538 = vld [vmem:[#allocation4 + $0x50] sm:$0xff]
          %v539 = vld [vmem:[#allocation4 + $0x58] sm:$0xff]
          %v540 = vld [vmem:[#allocation4 + $0x60] sm:$0xff]
          %v541 = vld [vmem:[#allocation4 + $0x68] sm:$0xff]
          %v542 = vld [vmem:[#allocation4 + $0x70] sm:$0xff]
          %v543 = vld [vmem:[#allocation4 + $0x78] sm:$0xff]
          %v544 = vld [vmem:[#allocation8] sm:$0xf]
          %v545 = vld [vmem:[#allocation8 + $0x4] sm:$0xf]
          %v546 = vld [vmem:[#allocation8 + $0x8] sm:$0xf]
          %v547 = vld [vmem:[#allocation8 + $0xc] sm:$0xf]
          %v548 = vld [vmem:[#allocation8 + $0x10] sm:$0xf]
          %v549 = vld [vmem:[#allocation8 + $0x14] sm:$0xf]
          %v550 = vld [vmem:[#allocation8 + $0x18] sm:$0xf]
          %v551 = vld [vmem:[#allocation8 + $0x1c] sm:$0xf]
          %v552 = vld [vmem:[#allocation8 + $0x20] sm:$0xf]
          %v553 = vld [vmem:[#allocation8 + $0x24] sm:$0xf]
          %v554 = vld [vmem:[#allocation8 + $0x28] sm:$0xf]
          %v555 = vld [vmem:[#allocation8 + $0x2c] sm:$0xf]
          %v556 = vld [vmem:[#allocation8 + $0x30] sm:$0xf]
          %v557 = vld [vmem:[#allocation8 + $0x34] sm:$0xf]
          %v558 = vld [vmem:[#allocation8 + $0x38] sm:$0xf]
          %v559 = vld [vmem:[#allocation8 + $0x3c] sm:$0xf]
          %s560 = sshra.s32 %s226, 3
          %s561 = sand.u32 %s226, 7
          %s562 = smul.u32 %s217, 16
          %s563 = sadd.s32 %s560, %s562
          %s564 = smul.addr %s563, 4
          %s565 = scalar_lea.vmem [#allocation2], %s564
          %v566 = vld [vmem:[%s565] sm:$0xf]
          %v567 = vld [vmem:[%s565 + $0x4] sm:$0xf]
          %v568 = vld [vmem:[%s565 + $0x8] sm:$0xf]
          %v569 = vld [vmem:[%s565 + $0xc] sm:$0xf]
          %v570 = vld [vmem:[%s565 + $0x10] sm:$0xf]
          %v571 = vld [vmem:[%s565 + $0x14] sm:$0xf]
          %v572 = vld [vmem:[%s565 + $0x18] sm:$0xf]
          %v573 = vld [vmem:[%s565 + $0x1c] sm:$0xf]
          %v574 = vld [vmem:[%s565 + $0x20] sm:$0xf]
          %v575 = vld [vmem:[%s565 + $0x24] sm:$0xf]
          %v576 = vld [vmem:[%s565 + $0x28] sm:$0xf]
          %v577 = vld [vmem:[%s565 + $0x2c] sm:$0xf]
          %v578 = vld [vmem:[%s565 + $0x30] sm:$0xf]
          %v579 = vld [vmem:[%s565 + $0x34] sm:$0xf]
          %v580 = vld [vmem:[%s565 + $0x38] sm:$0xf]
          %v581 = vld [vmem:[%s565 + $0x3c] sm:$0xf]
          %v598 = vunpack.c.l.b16 %v544
          %v599 = vunpack.c.l.b16 %v545
          %v600 = vunpack.c.l.b16 %v546
          %v601 = vunpack.c.l.b16 %v547
          %v602 = vunpack.c.l.b16 %v548
          %v603 = vunpack.c.l.b16 %v549
          %v604 = vunpack.c.l.b16 %v550
          %v605 = vunpack.c.l.b16 %v551
          %v606 = vunpack.c.l.b16 %v552
          %v607 = vunpack.c.l.b16 %v553
          %v608 = vunpack.c.l.b16 %v554
          %v609 = vunpack.c.l.b16 %v555
          %v610 = vunpack.c.l.b16 %v556
          %v611 = vunpack.c.l.b16 %v557
          %v612 = vunpack.c.l.b16 %v558
          %v613 = vunpack.c.l.b16 %v559
          %v614 = vpack.c.b16 %v599, %v598
          %v615 = vpack.c.b16 %v601, %v600
          %v616 = vpack.c.b16 %v603, %v602
          %v617 = vpack.c.b16 %v605, %v604
          %v618 = vpack.c.b16 %v607, %v606
          %v619 = vpack.c.b16 %v609, %v608
          %v620 = vpack.c.b16 %v611, %v610
          %v621 = vpack.c.b16 %v613, %v612
          %v646 = vunpack.c.l.b16 %v566
          %v647 = vunpack.c.l.b16 %v567
          %v648 = vunpack.c.l.b16 %v568
          %v649 = vunpack.c.l.b16 %v569
          %v650 = vunpack.c.l.b16 %v570
          %v651 = vunpack.c.l.b16 %v571
          %v652 = vunpack.c.l.b16 %v572
          %v653 = vunpack.c.l.b16 %v573
          %v654 = vunpack.c.l.b16 %v574
          %v655 = vunpack.c.l.b16 %v575
          %v656 = vunpack.c.l.b16 %v576
          %v657 = vunpack.c.l.b16 %v577
          %v658 = vunpack.c.l.b16 %v578
          %v659 = vunpack.c.l.b16 %v579
          %v660 = vunpack.c.l.b16 %v580
          %v661 = vunpack.c.l.b16 %v581
          %v662 = vpack.c.b16 %v647, %v646
          %v663 = vpack.c.b16 %v649, %v648
          %v664 = vpack.c.b16 %v651, %v650
          %v665 = vpack.c.b16 %v653, %v652
          %v666 = vpack.c.b16 %v655, %v654
          %v667 = vpack.c.b16 %v657, %v656
          %v668 = vpack.c.b16 %v659, %v658
          %v669 = vpack.c.b16 %v661, %v660
          %678 = vmatprep.subr.bf16.mxu0 0
          %679 = vmatpush1.bf16.msra.mxu0 %v669
          %680 = vmatprep.subr.bf16.mxu0 0
          %681 = vmatpush1.bf16.msra.mxu0 %v668
          %682 = vmatprep.subr.bf16.mxu0 0
          %683 = vmatpush1.bf16.msra.mxu0 %v667
          %684 = vmatprep.subr.bf16.mxu0 0
          %685 = vmatpush1.bf16.msra.mxu0 %v666
          %686 = vmatprep.subr.bf16.mxu0 0
          %687 = vmatpush1.bf16.msra.mxu0 %v665
          %688 = vmatprep.subr.bf16.mxu0 0
          %689 = vmatpush1.bf16.msra.mxu0 %v664
          %690 = vmatprep.subr.bf16.mxu0 0
          %691 = vmatpush1.bf16.msra.mxu0 %v663
          %692 = vmatprep.subr.bf16.mxu0 0
          %693 = vmatpush1.bf16.msra.mxu0 %v662
          %694 = vmatprep.subr.bf16.mxu0 0
          %695 = vmatpush2.bf16.msra.mxu0 0
          %696 = vmatprep.subr.bf16.mxu0 0
          %697 = vmatpush2.bf16.msra.mxu0 0
          %698 = vmatprep.subr.bf16.mxu0 0
          %699 = vmatpush2.bf16.msra.mxu0 0
          %700 = vmatprep.subr.bf16.mxu0 0
          %701 = vmatpush2.bf16.msra.mxu0 0
          %702 = vmatprep.subr.bf16.mxu0 0
          %703 = vmatpush2.bf16.msra.mxu0 0
          %704 = vmatprep.subr.bf16.mxu0 0
          %705 = vmatpush2.bf16.msra.mxu0 0
          %706 = vmatprep.subr.bf16.mxu0 0
          %707 = vmatpush2.bf16.msra.mxu0 0
          %708 = vmatprep.subr.bf16.mxu0 0
          %709 = vmatpush2.bf16.msra.mxu0 0
          %710 = vmatprep.mubr.bf16.mxu0 0
          %711 = vmatmul.mubr.bf16.gmra.mxu0 %v614
          %v712 = vpop.f32.mrf.mxu0
          %v713 = vadd.f32 0.0, %v712
          %v714 = vpop.f32.mrf.mxu0
          %v715 = vpop.f32.mrf.mxu0
          %v716 = vadd.f32 0.0, %v715
          %v717 = vpop.f32.mrf.mxu0
          %718 = vmatprep.mubr.bf16.mxu0 0
          %719 = vmatmul.mubr.bf16.gmra.mxu0 %v615
          %v720 = vpop.f32.mrf.mxu0
          %v721 = vadd.f32 0.0, %v720
          %v722 = vpop.f32.mrf.mxu0
          %v723 = vpop.f32.mrf.mxu0
          %v724 = vadd.f32 0.0, %v723
          %v725 = vpop.f32.mrf.mxu0
          %726 = vmatprep.mubr.bf16.mxu0 0
          %727 = vmatmul.mubr.bf16.gmra.mxu0 %v616
          %v728 = vpop.f32.mrf.mxu0
          %v729 = vadd.f32 0.0, %v728
          %v730 = vpop.f32.mrf.mxu0
          %v731 = vpop.f32.mrf.mxu0
          %v732 = vadd.f32 0.0, %v731
          %v733 = vpop.f32.mrf.mxu0
          %734 = vmatprep.mubr.bf16.mxu0 0
          %735 = vmatmul.mubr.bf16.gmra.mxu0 %v617
          %v736 = vpop.f32.mrf.mxu0
          %v737 = vadd.f32 0.0, %v736
          %v738 = vpop.f32.mrf.mxu0
          %v739 = vpop.f32.mrf.mxu0
          %v740 = vadd.f32 0.0, %v739
          %v741 = vpop.f32.mrf.mxu0
          %742 = vmatprep.mubr.bf16.mxu0 0
          %743 = vmatmul.mubr.bf16.gmra.mxu0 %v618
          %v744 = vpop.f32.mrf.mxu0
          %v745 = vadd.f32 0.0, %v744
          %v746 = vpop.f32.mrf.mxu0
          %v747 = vpop.f32.mrf.mxu0
          %v748 = vadd.f32 0.0, %v747
          %v749 = vpop.f32.mrf.mxu0
          %750 = vmatprep.mubr.bf16.mxu0 0
          %751 = vmatmul.mubr.bf16.gmra.mxu0 %v619
          %v752 = vpop.f32.mrf.mxu0
          %v753 = vadd.f32 0.0, %v752
          %v754 = vpop.f32.mrf.mxu0
          %v755 = vpop.f32.mrf.mxu0
          %v756 = vadd.f32 0.0, %v755
          %v757 = vpop.f32.mrf.mxu0
          %758 = vmatprep.mubr.bf16.mxu0 0
          %759 = vmatmul.mubr.bf16.gmra.mxu0 %v620
          %v760 = vpop.f32.mrf.mxu0
          %v761 = vadd.f32 0.0, %v760
          %v762 = vpop.f32.mrf.mxu0
          %v763 = vpop.f32.mrf.mxu0
          %v764 = vadd.f32 0.0, %v763
          %v765 = vpop.f32.mrf.mxu0
          %766 = vmatprep.mubr.bf16.mxu0 0
          %767 = vmatmul.mubr.bf16.gmra.mxu0 %v621
          %v768 = vpop.f32.mrf.mxu0
          %v769 = vadd.f32 0.0, %v768
          %v770 = vpop.f32.mrf.mxu0
          %v771 = vpop.f32.mrf.mxu0
          %v772 = vadd.f32 0.0, %v771
          %v773 = vpop.f32.mrf.mxu0
          %774 = vdwg.mxu0
          %v775 = vadd.f32 %v528, %v713
          %v776 = vadd.f32 %v529, %v716
          %v777 = vadd.f32 %v530, %v721
          %v778 = vadd.f32 %v531, %v724
          %v779 = vadd.f32 %v532, %v729
          %v780 = vadd.f32 %v533, %v732
          %v781 = vadd.f32 %v534, %v737
          %v782 = vadd.f32 %v535, %v740
          %v783 = vadd.f32 %v536, %v745
          %v784 = vadd.f32 %v537, %v748
          %v785 = vadd.f32 %v538, %v753
          %v786 = vadd.f32 %v539, %v756
          %v787 = vadd.f32 %v540, %v761
          %v788 = vadd.f32 %v541, %v764
          %v789 = vadd.f32 %v542, %v769
          %v790 = vadd.f32 %v543, %v772
          %791 = vst [vmem:[#allocation4] sm:$0xff] %v775
          %792 = vst [vmem:[#allocation4 + $0x8] sm:$0xff] %v776
          %793 = vst [vmem:[#allocation4 + $0x10] sm:$0xff] %v777
          %794 = vst [vmem:[#allocation4 + $0x18] sm:$0xff] %v778
          %795 = vst [vmem:[#allocation4 + $0x20] sm:$0xff] %v779
          %796 = vst [vmem:[#allocation4 + $0x28] sm:$0xff] %v780
          %797 = vst [vmem:[#allocation4 + $0x30] sm:$0xff] %v781
          %798 = vst [vmem:[#allocation4 + $0x38] sm:$0xff] %v782
          %799 = vst [vmem:[#allocation4 + $0x40] sm:$0xff] %v783
          %800 = vst [vmem:[#allocation4 + $0x48] sm:$0xff] %v784
          %801 = vst [vmem:[#allocation4 + $0x50] sm:$0xff] %v785
          %802 = vst [vmem:[#allocation4 + $0x58] sm:$0xff] %v786
          %803 = vst [vmem:[#allocation4 + $0x60] sm:$0xff] %v787
          %804 = vst [vmem:[#allocation4 + $0x68] sm:$0xff] %v788
          %805 = vst [vmem:[#allocation4 + $0x70] sm:$0xff] %v789
          %806 = vst [vmem:[#allocation4 + $0x78] sm:$0xff] %v790
        $region48: #{tpu_custom_call.1} parent=27 // pred_fallthru
          _
        // Predicated region
        $region49: #{tpu_custom_call.1} parent=27 // pred_check
          %p807 = pneg %p227
        $region50: #{tpu_custom_call.1} parent=27 // pred_check_branch
          %809 = sbr.rel (%p807) target = $region52
        $region51: #{tpu_custom_call.1} parent=27 // pred_region
          %v810 = vld [vmem:[#allocation4] sm:$0xff]
          %v811 = vld [vmem:[#allocation4 + $0x8] sm:$0xff]
          %v812 = vld [vmem:[#allocation4 + $0x10] sm:$0xff]
          %v813 = vld [vmem:[#allocation4 + $0x18] sm:$0xff]
          %v814 = vld [vmem:[#allocation4 + $0x20] sm:$0xff]
          %v815 = vld [vmem:[#allocation4 + $0x28] sm:$0xff]
          %v816 = vld [vmem:[#allocation4 + $0x30] sm:$0xff]
          %v817 = vld [vmem:[#allocation4 + $0x38] sm:$0xff]
          %v818 = vld [vmem:[#allocation4 + $0x40] sm:$0xff]
          %v819 = vld [vmem:[#allocation4 + $0x48] sm:$0xff]
          %v820 = vld [vmem:[#allocation4 + $0x50] sm:$0xff]
          %v821 = vld [vmem:[#allocation4 + $0x58] sm:$0xff]
          %v822 = vld [vmem:[#allocation4 + $0x60] sm:$0xff]
          %v823 = vld [vmem:[#allocation4 + $0x68] sm:$0xff]
          %v824 = vld [vmem:[#allocation4 + $0x70] sm:$0xff]
          %v825 = vld [vmem:[#allocation4 + $0x78] sm:$0xff]
          %v826 = vpack.c.bf16 %v811, %v810
          %v827 = vpack.c.bf16 %v813, %v812
          %v828 = vpack.c.bf16 %v815, %v814
          %v829 = vpack.c.bf16 %v817, %v816
          %v830 = vpack.c.bf16 %v819, %v818
          %v831 = vpack.c.bf16 %v821, %v820
          %v832 = vpack.c.bf16 %v823, %v822
          %v833 = vpack.c.bf16 %v825, %v824
          %v842 = vunpack.c.l.b16 %v826
          %v843 = vunpack.c.h.b16 %v826
          %v844 = vunpack.c.l.b16 %v827
          %v845 = vunpack.c.h.b16 %v827
          %v846 = vunpack.c.l.b16 %v828
          %v847 = vunpack.c.h.b16 %v828
          %v848 = vunpack.c.l.b16 %v829
          %v849 = vunpack.c.h.b16 %v829
          %v850 = vunpack.c.l.b16 %v830
          %v851 = vunpack.c.h.b16 %v830
          %v852 = vunpack.c.l.b16 %v831
          %v853 = vunpack.c.h.b16 %v831
          %v854 = vunpack.c.l.b16 %v832
          %v855 = vunpack.c.h.b16 %v832
          %v856 = vunpack.c.l.b16 %v833
          %v857 = vunpack.c.h.b16 %v833
          %v858 = vpack.c.b16 %v842, %v842
          %v859 = vpack.c.b16 %v843, %v843
          %v860 = vpack.c.b16 %v844, %v844
          %v861 = vpack.c.b16 %v845, %v845
          %v862 = vpack.c.b16 %v846, %v846
          %v863 = vpack.c.b16 %v847, %v847
          %v864 = vpack.c.b16 %v848, %v848
          %v865 = vpack.c.b16 %v849, %v849
          %v866 = vpack.c.b16 %v850, %v850
          %v867 = vpack.c.b16 %v851, %v851
          %v868 = vpack.c.b16 %v852, %v852
          %v869 = vpack.c.b16 %v853, %v853
          %v870 = vpack.c.b16 %v854, %v854
          %v871 = vpack.c.b16 %v855, %v855
          %v872 = vpack.c.b16 %v856, %v856
          %v873 = vpack.c.b16 %v857, %v857
          %s890 = sshra.s32 %s225, 3
          %s891 = sand.u32 %s225, 7
          %s892 = smul.u32 %s224, 16
          %s893 = sadd.s32 %s890, %s892
          %s894 = smul.addr %s893, 4
          %s895 = scalar_lea.vmem [#allocation2], %s894
          %896 = vst [vmem:[%s895] sm:$0xf] %v858
          %897 = vst [vmem:[%s895 + $0x4] sm:$0xf] %v859
          %898 = vst [vmem:[%s895 + $0x8] sm:$0xf] %v860
          %899 = vst [vmem:[%s895 + $0xc] sm:$0xf] %v861
          %900 = vst [vmem:[%s895 + $0x10] sm:$0xf] %v862
          %901 = vst [vmem:[%s895 + $0x14] sm:$0xf] %v863
          %902 = vst [vmem:[%s895 + $0x18] sm:$0xf] %v864
          %903 = vst [vmem:[%s895 + $0x1c] sm:$0xf] %v865
          %904 = vst [vmem:[%s895 + $0x20] sm:$0xf] %v866
          %905 = vst [vmem:[%s895 + $0x24] sm:$0xf] %v867
          %906 = vst [vmem:[%s895 + $0x28] sm:$0xf] %v868
          %907 = vst [vmem:[%s895 + $0x2c] sm:$0xf] %v869
          %908 = vst [vmem:[%s895 + $0x30] sm:$0xf] %v870
          %909 = vst [vmem:[%s895 + $0x34] sm:$0xf] %v871
          %910 = vst [vmem:[%s895 + $0x38] sm:$0xf] %v872
          %911 = vst [vmem:[%s895 + $0x3c] sm:$0xf] %v873
          %s912 = scalar_lea.vmem [#allocation3], %s225
          %v913 = vld [vmem:[%s912] sm:$0xff]
          %v914 = vld [vmem:[%s912 + $0x8] sm:$0xff]
          %v915 = vld [vmem:[%s912 + $0x10] sm:$0xff]
          %v916 = vld [vmem:[%s912 + $0x18] sm:$0xff]
          %v917 = vld [vmem:[%s912 + $0x20] sm:$0xff]
          %v918 = vld [vmem:[%s912 + $0x28] sm:$0xff]
          %v919 = vld [vmem:[%s912 + $0x30] sm:$0xff]
          %v920 = vld [vmem:[%s912 + $0x38] sm:$0xff]
          %v921 = vld [vmem:[%s912 + $0x40] sm:$0xff]
          %v922 = vld [vmem:[%s912 + $0x48] sm:$0xff]
          %v923 = vld [vmem:[%s912 + $0x50] sm:$0xff]
          %v924 = vld [vmem:[%s912 + $0x58] sm:$0xff]
          %v925 = vld [vmem:[%s912 + $0x60] sm:$0xff]
          %v926 = vld [vmem:[%s912 + $0x68] sm:$0xff]
          %v927 = vld [vmem:[%s912 + $0x70] sm:$0xff]
          %v928 = vld [vmem:[%s912 + $0x78] sm:$0xff]
          %s929 = scalar_select %p524, 1, 0
          %v930 = vstv %s929
          %vm931 = vcmp.eq.s32.totalorder %v930, 1
          %v932 = vsel %vm931, %v913, 0.0
          %v933 = vsel %vm931, %v914, 0.0
          %v934 = vsel %vm931, %v915, 0.0
          %v935 = vsel %vm931, %v916, 0.0
          %v936 = vsel %vm931, %v917, 0.0
          %v937 = vsel %vm931, %v918, 0.0
          %v938 = vsel %vm931, %v919, 0.0
          %v939 = vsel %vm931, %v920, 0.0
          %v940 = vsel %vm931, %v921, 0.0
          %v941 = vsel %vm931, %v922, 0.0
          %v942 = vsel %vm931, %v923, 0.0
          %v943 = vsel %vm931, %v924, 0.0
          %v944 = vsel %vm931, %v925, 0.0
          %v945 = vsel %vm931, %v926, 0.0
          %v946 = vsel %vm931, %v927, 0.0
          %v947 = vsel %vm931, %v928, 0.0
          %v948 = vadd.f32 %v932, %v810
          %v949 = vadd.f32 %v933, %v811
          %v950 = vadd.f32 %v934, %v812
          %v951 = vadd.f32 %v935, %v813
          %v952 = vadd.f32 %v936, %v814
          %v953 = vadd.f32 %v937, %v815
          %v954 = vadd.f32 %v938, %v816
          %v955 = vadd.f32 %v939, %v817
          %v956 = vadd.f32 %v940, %v818
          %v957 = vadd.f32 %v941, %v819
          %v958 = vadd.f32 %v942, %v820
          %v959 = vadd.f32 %v943, %v821
          %v960 = vadd.f32 %v944, %v822
          %v961 = vadd.f32 %v945, %v823
          %v962 = vadd.f32 %v946, %v824
          %v963 = vadd.f32 %v947, %v825
          %964 = vst [vmem:[%s912] sm:$0xff] %v948
          %965 = vst [vmem:[%s912 + $0x8] sm:$0xff] %v949
          %966 = vst [vmem:[%s912 + $0x10] sm:$0xff] %v950
          %967 = vst [vmem:[%s912 + $0x18] sm:$0xff] %v951
          %968 = vst [vmem:[%s912 + $0x20] sm:$0xff] %v952
          %969 = vst [vmem:[%s912 + $0x28] sm:$0xff] %v953
          %970 = vst [vmem:[%s912 + $0x30] sm:$0xff] %v954
          %971 = vst [vmem:[%s912 + $0x38] sm:$0xff] %v955
          %972 = vst [vmem:[%s912 + $0x40] sm:$0xff] %v956
          %973 = vst [vmem:[%s912 + $0x48] sm:$0xff] %v957
          %974 = vst [vmem:[%s912 + $0x50] sm:$0xff] %v958
          %975 = vst [vmem:[%s912 + $0x58] sm:$0xff] %v959
          %976 = vst [vmem:[%s912 + $0x60] sm:$0xff] %v960
          %977 = vst [vmem:[%s912 + $0x68] sm:$0xff] %v961
          %978 = vst [vmem:[%s912 + $0x70] sm:$0xff] %v962
          %979 = vst [vmem:[%s912 + $0x78] sm:$0xff] %v963
          %980 = vst [vmem:[#allocation10] sm:$0xff] %v948
          %981 = vst [vmem:[#allocation10 + $0x8] sm:$0xff] %v949
          %982 = vst [vmem:[#allocation10 + $0x10] sm:$0xff] %v950
          %983 = vst [vmem:[#allocation10 + $0x18] sm:$0xff] %v951
          %984 = vst [vmem:[#allocation10 + $0x20] sm:$0xff] %v952
          %985 = vst [vmem:[#allocation10 + $0x28] sm:$0xff] %v953
          %986 = vst [vmem:[#allocation10 + $0x30] sm:$0xff] %v954
          %987 = vst [vmem:[#allocation10 + $0x38] sm:$0xff] %v955
          %988 = vst [vmem:[#allocation10 + $0x40] sm:$0xff] %v956
          %989 = vst [vmem:[#allocation10 + $0x48] sm:$0xff] %v957
          %990 = vst [vmem:[#allocation10 + $0x50] sm:$0xff] %v958
          %991 = vst [vmem:[#allocation10 + $0x58] sm:$0xff] %v959
          %992 = vst [vmem:[#allocation10 + $0x60] sm:$0xff] %v960
          %993 = vst [vmem:[#allocation10 + $0x68] sm:$0xff] %v961
          %994 = vst [vmem:[#allocation10 + $0x70] sm:$0xff] %v962
          %995 = vst [vmem:[#allocation10 + $0x78] sm:$0xff] %v963
        $region52: #{tpu_custom_call.1} parent=27 // pred_fallthru
          _
        // Predicated region
        $region53: #{tpu_custom_call.1} parent=27 // pred_check
          %p996 = pneg %p113
        $region54: #{tpu_custom_call.1} parent=27 // pred_check_branch
          %998 = sbr.rel (%p996) target = $region56
        $region55: #{tpu_custom_call.1} parent=27 // pred_region
          %s999 = smul.u32 16, %s24
          %s1001 = ssub.s32 2048, 2048
          %1002 = vsyncadd [#allocation7], %s1001
          %s1003 = smul.addr %s999, 128
          %s1004 = scalar_lea.hbm %s2, %s1003
          %s1005 = sshll.u32 [#allocation10], 4
          %s1006 = int_to_ptr.vmem [resolvable:$true] %s1005
          %1011 = dma.vmem_to_hbm [thread:$0]  %s1006, 2048, %s1004, [#allocation7], 128, 128, 8
        $region56: #{tpu_custom_call.1} parent=27 // pred_fallthru
          _
        // Predicated region
        $region57: #{tpu_custom_call.1} parent=27 // pred_check
          %p1012 = pneg %p113
        $region58: #{tpu_custom_call.1} parent=27 // pred_check_branch
          %1014 = sbr.rel (%p1012) target = $region60
        $region59: #{tpu_custom_call.1} parent=27 // pred_region
          %1015 = dma.done [#allocation7], 2048
        $region60: #{tpu_custom_call.1} parent=27 // pred_fallthru
          _
      $region28: #{tpu_custom_call.1} parent=5 // pred_fallthru
        _
      %p1016 = scmp.le.s32.totalorder 2, %s13
      // Predicated region
      $region61: #{tpu_custom_call.1} parent=5 // pred_check
        %p1017 = pneg %p1016
      $region62: #{tpu_custom_call.1} parent=5 // pred_check_branch
        %1019 = sbr.rel (%p1017) target = $region64
      $region63: #{tpu_custom_call.1} parent=5 // pred_region
        %s1020 = ssub.s32 %s13, 2
      $region64: #{tpu_custom_call.1} parent=5 // pred_fallthru
        _
    $region6: #{tpu_custom_call.1} parent=1 // loop_footer
      %s17 = sadd.s32 1, %s13
    $region7: #{tpu_custom_call.1} parent=1 // loop_footer_branch
      %12 = sbr.rel target = $region3
    $region8: #{tpu_custom_call.1} parent=1 // loop_exit
      _
    %1021 = vsyncpa [#allocation6], 1
    %s1022 = scalar_lea.sflag [#allocation6], 1
    %1023 = vsyncpa %s1022, 1
    %1024 = vsyncpa [#allocation9], 1
    %1025 = vsyncpa [#allocation7], 1
    %s1026 = scalar_lea.sflag [#allocation7], 1
    %1027 = vsyncpa %s1026, 1

</llo_original>
